<compile_context>
chip_gen: v5e
topology: v5e:2x2
jax: 0.10.0
libtpu: 0.0.40
codegen_flags: <defaults>
</compile_context>

<pallas_src>
import functools

import jax
import jax.numpy as jnp
from jax.experimental import pallas as pl
from jax.experimental.pallas import tpu as pltpu


def _round_up(n: int, m: int) -> int:
    return ((n + m - 1) // m) * m


# ---------------------------------------------------------------------------
# Fused kernel: x -> [Linear+Sigmoid]*L_enc -> Linear (decoder)
# refs layout: (x_ref, w0, b0, w1, b1, ..., w_{L-1}, b_{L-1}, o_ref)
# ---------------------------------------------------------------------------
def _fused_autoencoder_kernel(*refs, num_layers: int):
    x_ref = refs[0]
    o_ref = refs[1 + 2 * num_layers]

    y = x_ref[...].astype(jnp.float32)
    for layer in range(num_layers):
        w_ref = refs[1 + 2 * layer]          # (K_pad, N_pad), bf16 (default) or f32
        b_ref = refs[2 + 2 * layer]          # (1, N_pad), f32

        # MXU matmul in the weight dtype (bf16 fast path), f32 accumulation.
        y = jnp.dot(y.astype(w_ref.dtype), w_ref[...],
                    preferred_element_type=jnp.float32)
        y = y + b_ref[...]
        if layer != num_layers - 1:          # encoder layers only; decoder is plain Linear
            # sigmoid(y) == 0.5*(tanh(0.5*y)+1): single EUP push, +/x stay on the VPU.
            y = 0.5 * (jnp.tanh(0.5 * y) + 1.0)

    o_ref[...] = y.astype(o_ref.dtype)
    # TODO(synk): for deep stacks / very wide hidden layers, stage y through a ping-pong
    # pltpu.VMEM((tm, max_Np), f32) scratch pair to bound vreg live ranges / spills.


# ---------------------------------------------------------------------------
# One-time parameter preparation (outside the hot path):
#   transpose to (in, out); pad the FIRST layer's in-features to a multiple of 128
#   (lane-dense x loads); pad all out-features to multiples of 128; pad layer l's
#   in-features to layer l-1's padded out-features. Zero padding is exact: padded
#   input columns hit zero weight rows, padded output columns get zero weights +
#   zero bias (sigmoid(0)=0.5 in hidden pads is killed by the next layer's zero rows;
#   decoder pads come out exactly 0 and are sliced off).
# ---------------------------------------------------------------------------
def prepare_params(params, *, use_bf16: bool = True):
    prepared = []
    prev_out_pad = None
    for (w, b) in params:
        out_f, in_f = w.shape
        w_t = jnp.asarray(w, jnp.float32).T                 # (in_f, out_f)
        in_pad = _round_up(in_f, 128) if prev_out_pad is None else prev_out_pad
        out_pad = _round_up(out_f, 128)
        w_t = jnp.pad(w_t, ((0, in_pad - in_f), (0, out_pad - out_f)))
        b2 = jnp.pad(jnp.asarray(b, jnp.float32).reshape(1, out_f),
                     ((0, 0), (0, out_pad - out_f)))
        if use_bf16:
            w_t = w_t.astype(jnp.bfloat16)
        prepared.append((w_t, b2))
        prev_out_pad = out_pad
    return prepared


def _choose_tm(M: int, tm_max: int) -> int:
    """Batch tile: multiple of 8 sublanes, <= tm_max, and (for M > 8) sized so the
    grid has >= 2 steps so v7x's second TensorCore gets work."""
    if M <= 8:
        return 8
    tm = _round_up(-(-M // 2), 8)            # ceil(M/2), rounded up to 8
    return min(tm, tm_max)


# ---------------------------------------------------------------------------
# Forward wrapper
# ---------------------------------------------------------------------------
def autoencoder_forward(x, prepared_params, in_features: int, out_features: int,
                        *, tm_max: int = 256, out_dtype=jnp.float32):
    M, F_in = x.shape
    assert F_in == in_features
    num_layers = len(prepared_params)
    F_in_pad = prepared_params[0][0].shape[0]
    assert F_in_pad >= F_in, "first-layer padded in_features mismatch"
    F_out_pad = prepared_params[-1][0].shape[1]
    out_itemsize = jnp.dtype(out_dtype).itemsize

    # tm up to 256 (fills the 256x256 MXU on v6e/v7x, amortizes per-step overhead);
    # pass tm_max=128 on v5e if desired (its MXU is 4x128x128).
    tm = _choose_tm(M, tm_max)
    M_pad = _round_up(M, tm)

    # Lane-dense x: pad features to F_in_pad (and batch to M_pad) once here.
    x_p = x.astype(jnp.float32)
    if M_pad != M or F_in_pad != F_in:
        x_p = jnp.pad(x_p, ((0, M_pad - M), (0, F_in_pad - F_in)))

    flat_inputs = [x_p]
    flops = 0
    transcendentals = 0
    bytes_accessed = M_pad * F_in_pad * 4
    weight_bytes = 0
    max_np = F_out_pad
    for idx, (w_t, b2) in enumerate(prepared_params):
        Kp, Np = w_t.shape
        flat_inputs.extend([w_t, b2])
        flops += 2 * M_pad * Kp * Np
        if idx != num_layers - 1:
            transcendentals += M_pad * Np
        weight_bytes += w_t.size * w_t.dtype.itemsize + b2.size * b2.dtype.itemsize
        max_np = max(max_np, Np)
    bytes_accessed += weight_bytes + M_pad * F_out_pad * out_itemsize

    kernel = functools.partial(_fused_autoencoder_kernel, num_layers=num_layers)

    def build(single_buffer_weights: bool):
        # Explicit VMEM budget: resident weights (x1 or x2 buffers) + double-buffered
        # x/out tiles + spill headroom for the (tm x widest N_pad) f32 intermediates.
        wbuf = 1 if single_buffer_weights else 2
        vmem_need = (weight_bytes * wbuf
                     + 2 * tm * F_in_pad * 4
                     + 2 * tm * F_out_pad * out_itemsize
                     + 2 * tm * max_np * 4
                     + (4 << 20))
        vmem_limit = min(max(vmem_need, 32 << 20), 64 << 20)   # cap at v7x per-TC VMEM

        in_specs = [pl.BlockSpec((tm, F_in_pad), lambda i: (i, 0))]
        for (w_t, b2) in prepared_params:
            Kp, Np = w_t.shape
            if single_buffer_weights:
                # Constant index_maps -> fetched once; single buffer halves their footprint.
                in_specs.append(pl.BlockSpec((Kp, Np), lambda i: (0, 0),
                                             pipeline_mode=pl.Buffered(1)))
                in_specs.append(pl.BlockSpec((1, Np), lambda i: (0, 0),
                                             pipeline_mode=pl.Buffered(1)))
            else:
                in_specs.append(pl.BlockSpec((Kp, Np), lambda i: (0, 0)))
                in_specs.append(pl.BlockSpec((1, Np), lambda i: (0, 0)))

        return pl.pallas_call(
            kernel,
            out_shape=jax.ShapeDtypeStruct((M_pad, F_out_pad), out_dtype),
            grid_spec=pltpu.PrefetchScalarGridSpec(
                num_scalar_prefetch=0,
                grid=(M_pad // tm,),
                in_specs=in_specs,
                out_specs=pl.BlockSpec((tm, F_out_pad), lambda i: (i, 0)),
            ),
            compiler_params=pltpu.CompilerParams(
                dimension_semantics=("parallel",),   # batch shards across TCs on v7x megacore
                vmem_limit_bytes=vmem_limit,
            ),
            cost_estimate=pl.CostEstimate(
                flops=flops,
                transcendentals=transcendentals,
                bytes_accessed=bytes_accessed,
            ),
        )

    try:
        out_p = build(single_buffer_weights=True)(*flat_inputs)
    except Exception:
        # Fallback for JAX versions where pipeline_mode=pl.Buffered(1) is unsupported.
        out_p = build(single_buffer_weights=False)(*flat_inputs)

    # Strip batch/feature padding (cheap slice of the lane-dense kernel output).
    return out_p[:M, :out_features]
    # TODO(synk): once sum(weight bytes) x buffer-count exceeds ~60 MiB (v7x budget: 64 MiB/TC,
    # and with "parallel" each TC holds its own weight copy; ~120 MiB on v5e/v6e), switch to
    # K/N-tiled grid with the reduction axis LAST ("arbitrary"), a VMEM f32 accumulator and
    # pl.when init/finalize, keeping the batch axis "parallel".


# ---------------------------------------------------------------------------
# Param init (PyTorch nn.Linear-style uniform) and pure-JAX reference
# ---------------------------------------------------------------------------
def init_autoencoder_params(key, inout_feature_size, hidden_layer_sizes):
    params = []
    sizes = [inout_feature_size] + list(hidden_layer_sizes)
    for i in range(len(hidden_layer_sizes)):                 # encoder: Linear + Sigmoid
        fan_in, fan_out = sizes[i], sizes[i + 1]
        key, kw, kb = jax.random.split(key, 3)
        bound = 1.0 / jnp.sqrt(fan_in)
        w = jax.random.uniform(kw, (fan_out, fan_in), jnp.float32, -bound, bound)
        b = jax.random.uniform(kb, (fan_out,), jnp.float32, -bound, bound)
        params.append((w, b))
    fan_in = hidden_layer_sizes[-1]                          # decoder: plain Linear
    key, kw, kb = jax.random.split(key, 3)
    bound = 1.0 / jnp.sqrt(fan_in)
    w = jax.random.uniform(kw, (inout_feature_size, fan_in), jnp.float32, -bound, bound)
    b = jax.random.uniform(kb, (inout_feature_size,), jnp.float32, -bound, bound)
    params.append((w, b))
    return params


def autoencoder_ref(x, params):
    y = x
    num_layers = len(params)
    for idx, (w, b) in enumerate(params):
        y = y @ w.T + b
        if idx != num_layers - 1:
            y = jax.nn.sigmoid(y)
    return y


if __name__ == "__main__":
    key = jax.random.PRNGKey(0)
    batch = 8
    inout_feature_size = 16
    hidden_layer_sizes = (32, 8)

    key, kx = jax.random.split(key)
    x = jax.random.normal(kx, (batch, inout_feature_size), jnp.float32)

    params = init_autoencoder_params(key, inout_feature_size, hidden_layer_sizes)
    ref = autoencoder_ref(x, params)

    # Default path: bf16 weights, f32 accumulation (MXU fast path on all generations).
    prep = prepare_params(params)                      # use_bf16=True by default
    out = jax.block_until_ready(
        autoencoder_forward(x, prep, inout_feature_size, inout_feature_size))
    assert out.shape == (batch, inout_feature_size)
    assert jnp.allclose(out, ref, atol=5e-2, rtol=5e-2)

    # f32 weight path (numerical check against the PyTorch-equivalent reference).
    # NOTE: TPU f32 matmul uses reduced-precision MXU passes by default; at small K the
    # 1e-5 tolerance holds, for strict parity at large K request Precision.HIGHEST.
    prep_f32 = prepare_params(params, use_bf16=False)
    out_f32 = jax.block_until_ready(
        autoencoder_forward(x, prep_f32, inout_feature_size, inout_feature_size))
    assert jnp.allclose(out_f32, ref, atol=1e-5, rtol=1e-5)

    # Multi-step grid path (exercises tm selection / both-TC sharding on v7x).
    key, kx2 = jax.random.split(key)
    x_big = jax.random.normal(kx2, (48, inout_feature_size), jnp.float32)
    ref_big = autoencoder_ref(x_big, params)
    out_big = jax.block_until_ready(
        autoencoder_forward(x_big, prep, inout_feature_size, inout_feature_size))
    assert out_big.shape == (48, inout_feature_size)
    assert jnp.allclose(out_big, ref_big, atol=5e-2, rtol=5e-2)

    print("KERNEL_OK")
</pallas_src>

<mosaic_0001>
module attributes {stable_mosaic.version = 11 : i64} {
  func.func @_fused_autoencoder_kernel(%arg0: i32, %arg1: memref<8x128xf32, #tpu.memory_space<vmem>>, %arg2: memref<128x128xbf16, #tpu.memory_space<vmem>>, %arg3: memref<1x128xf32, #tpu.memory_space<vmem>>, %arg4: memref<128x128xbf16, #tpu.memory_space<vmem>>, %arg5: memref<1x128xf32, #tpu.memory_space<vmem>>, %arg6: memref<128x128xbf16, #tpu.memory_space<vmem>>, %arg7: memref<1x128xf32, #tpu.memory_space<vmem>>, %arg8: memref<8x128xf32, #tpu.memory_space<vmem>>) attributes {dimension_semantics = [#tpu.dimension_semantics<parallel>], iteration_bounds = array<i64: 1>, scalar_prefetch = 0 : i64, scratch_operands = 0 : i64, tpu.core_type = #tpu.core_type<tc>, window_params = [{transform_indices = @transform_0, window_bounds = array<i64: 8, 128>}, {pipeline_mode = #tpu.pipeline_mode<synchronous>, transform_indices = @transform_1, window_bounds = array<i64: 128, 128>}, {pipeline_mode = #tpu.pipeline_mode<synchronous>, transform_indices = @transform_2, window_bounds = array<i64: 1, 128>}, {pipeline_mode = #tpu.pipeline_mode<synchronous>, transform_indices = @transform_3, window_bounds = array<i64: 128, 128>}, {pipeline_mode = #tpu.pipeline_mode<synchronous>, transform_indices = @transform_4, window_bounds = array<i64: 1, 128>}, {pipeline_mode = #tpu.pipeline_mode<synchronous>, transform_indices = @transform_5, window_bounds = array<i64: 128, 128>}, {pipeline_mode = #tpu.pipeline_mode<synchronous>, transform_indices = @transform_6, window_bounds = array<i64: 1, 128>}, {transform_indices = @transform_7, window_bounds = array<i64: 8, 128>}]} {
    %c0 = arith.constant 0 : index
    %c0_0 = arith.constant 0 : index
    %0 = vector.load %arg1[%c0, %c0_0] : memref<8x128xf32, #tpu.memory_space<vmem>>, vector<8x128xf32>
    %1 = arith.truncf %0 : vector<8x128xf32> to vector<8x128xbf16>
    %c0_1 = arith.constant 0 : index
    %c0_2 = arith.constant 0 : index
    %2 = vector.load %arg2[%c0_1, %c0_2] : memref<128x128xbf16, #tpu.memory_space<vmem>>, vector<128x128xbf16>
    %cst = arith.constant dense<0.000000e+00> : vector<8x128xf32>
    %3 = tpu.matmul %1, %2, %cst {dimension_numbers = #tpu.dot_dimension_numbers<[1], [0], [0], [1], [0, 0, 1, 1], [], []>} : vector<8x128xbf16>, vector<128x128xbf16>, vector<8x128xf32> -> vector<8x128xf32>
    %c0_3 = arith.constant 0 : index
    %c0_4 = arith.constant 0 : index
    %4 = vector.load %arg3[%c0_3, %c0_4] : memref<1x128xf32, #tpu.memory_space<vmem>>, vector<1x128xf32>
    %5 = vector.broadcast %4 : vector<1x128xf32> to vector<8x128xf32>
    %6 = arith.addf %3, %5 : vector<8x128xf32>
    %cst_5 = arith.constant 5.000000e-01 : f32
    %7 = vector.broadcast %cst_5 : f32 to vector<8x128xf32>
    %8 = arith.mulf %7, %6 : vector<8x128xf32>
    %9 = math.tanh %8 : vector<8x128xf32>
    %cst_6 = arith.constant 1.000000e+00 : f32
    %10 = vector.broadcast %cst_6 : f32 to vector<8x128xf32>
    %11 = arith.addf %9, %10 : vector<8x128xf32>
    %cst_7 = arith.constant 5.000000e-01 : f32
    %12 = vector.broadcast %cst_7 : f32 to vector<8x128xf32>
    %13 = arith.mulf %12, %11 : vector<8x128xf32>
    %14 = arith.truncf %13 : vector<8x128xf32> to vector<8x128xbf16>
    %c0_8 = arith.constant 0 : index
    %c0_9 = arith.constant 0 : index
    %15 = vector.load %arg4[%c0_8, %c0_9] : memref<128x128xbf16, #tpu.memory_space<vmem>>, vector<128x128xbf16>
    %cst_10 = arith.constant dense<0.000000e+00> : vector<8x128xf32>
    %16 = tpu.matmul %14, %15, %cst_10 {dimension_numbers = #tpu.dot_dimension_numbers<[1], [0], [0], [1], [0, 0, 1, 1], [], []>} : vector<8x128xbf16>, vector<128x128xbf16>, vector<8x128xf32> -> vector<8x128xf32>
    %c0_11 = arith.constant 0 : index
    %c0_12 = arith.constant 0 : index
    %17 = vector.load %arg5[%c0_11, %c0_12] : memref<1x128xf32, #tpu.memory_space<vmem>>, vector<1x128xf32>
    %18 = vector.broadcast %17 : vector<1x128xf32> to vector<8x128xf32>
    %19 = arith.addf %16, %18 : vector<8x128xf32>
    %cst_13 = arith.constant 5.000000e-01 : f32
    %20 = vector.broadcast %cst_13 : f32 to vector<8x128xf32>
    %21 = arith.mulf %20, %19 : vector<8x128xf32>
    %22 = math.tanh %21 : vector<8x128xf32>
    %cst_14 = arith.constant 1.000000e+00 : f32
    %23 = vector.broadcast %cst_14 : f32 to vector<8x128xf32>
    %24 = arith.addf %22, %23 : vector<8x128xf32>
    %cst_15 = arith.constant 5.000000e-01 : f32
    %25 = vector.broadcast %cst_15 : f32 to vector<8x128xf32>
    %26 = arith.mulf %25, %24 : vector<8x128xf32>
    %27 = arith.truncf %26 : vector<8x128xf32> to vector<8x128xbf16>
    %c0_16 = arith.constant 0 : index
    %c0_17 = arith.constant 0 : index
    %28 = vector.load %arg6[%c0_16, %c0_17] : memref<128x128xbf16, #tpu.memory_space<vmem>>, vector<128x128xbf16>
    %cst_18 = arith.constant dense<0.000000e+00> : vector<8x128xf32>
    %29 = tpu.matmul %27, %28, %cst_18 {dimension_numbers = #tpu.dot_dimension_numbers<[1], [0], [0], [1], [0, 0, 1, 1], [], []>} : vector<8x128xbf16>, vector<128x128xbf16>, vector<8x128xf32> -> vector<8x128xf32>
    %c0_19 = arith.constant 0 : index
    %c0_20 = arith.constant 0 : index
    %30 = vector.load %arg7[%c0_19, %c0_20] : memref<1x128xf32, #tpu.memory_space<vmem>>, vector<1x128xf32>
    %31 = vector.broadcast %30 : vector<1x128xf32> to vector<8x128xf32>
    %32 = arith.addf %29, %31 : vector<8x128xf32>
    %c0_21 = arith.constant 0 : index
    %c0_22 = arith.constant 0 : index
    %33 = vector.load %arg8[%c0_21, %c0_22] : memref<8x128xf32, #tpu.memory_space<vmem>>, vector<8x128xf32>
    tpu.vector_store %arg8[%c0_21, %c0_22], %32 {strides = array<i32>} : memref<8x128xf32, #tpu.memory_space<vmem>>, vector<8x128xf32>,
    return
  }
  func.func @transform_0(%arg0: i32) -> (i32, i32) {
    %c0_i32 = arith.constant 0 : i32
    %c0_i32_0 = arith.constant 0 : i32
    return %arg0, %c0_i32 : i32, i32
  }
  func.func @transform_1(%arg0: i32) -> (i32, i32) {
    %c0_i32 = arith.constant 0 : i32
    %c0_i32_0 = arith.constant 0 : i32
    %c0_i32_1 = arith.constant 0 : i32
    return %c0_i32, %c0_i32_0 : i32, i32
  }
  func.func @transform_2(%arg0: i32) -> (i32, i32) {
    %c0_i32 = arith.constant 0 : i32
    %c0_i32_0 = arith.constant 0 : i32
    %c0_i32_1 = arith.constant 0 : i32
    return %c0_i32, %c0_i32_0 : i32, i32
  }
  func.func @transform_3(%arg0: i32) -> (i32, i32) {
    %c0_i32 = arith.constant 0 : i32
    %c0_i32_0 = arith.constant 0 : i32
    %c0_i32_1 = arith.constant 0 : i32
    return %c0_i32, %c0_i32_0 : i32, i32
  }
  func.func @transform_4(%arg0: i32) -> (i32, i32) {
    %c0_i32 = arith.constant 0 : i32
    %c0_i32_0 = arith.constant 0 : i32
    %c0_i32_1 = arith.constant 0 : i32
    return %c0_i32, %c0_i32_0 : i32, i32
  }
  func.func @transform_5(%arg0: i32) -> (i32, i32) {
    %c0_i32 = arith.constant 0 : i32
    %c0_i32_0 = arith.constant 0 : i32
    %c0_i32_1 = arith.constant 0 : i32
    return %c0_i32, %c0_i32_0 : i32, i32
  }
  func.func @transform_6(%arg0: i32) -> (i32, i32) {
    %c0_i32 = arith.constant 0 : i32
    %c0_i32_0 = arith.constant 0 : i32
    %c0_i32_1 = arith.constant 0 : i32
    return %c0_i32, %c0_i32_0 : i32, i32
  }
  func.func @transform_7(%arg0: i32) -> (i32, i32) {
    %c0_i32 = arith.constant 0 : i32
    %c0_i32_0 = arith.constant 0 : i32
    return %arg0, %c0_i32 : i32, i32
  }
}

module attributes {stable_mosaic.version = 11 : i64} {
  func.func @_fused_autoencoder_kernel(%arg0: i32, %arg1: memref<8x128xf32, #tpu.memory_space<vmem>>, %arg2: memref<128x128xbf16, #tpu.memory_space<vmem>>, %arg3: memref<1x128xf32, #tpu.memory_space<vmem>>, %arg4: memref<128x128xbf16, #tpu.memory_space<vmem>>, %arg5: memref<1x128xf32, #tpu.memory_space<vmem>>, %arg6: memref<128x128xbf16, #tpu.memory_space<vmem>>, %arg7: memref<1x128xf32, #tpu.memory_space<vmem>>, %arg8: memref<8x128xf32, #tpu.memory_space<vmem>>) attributes {dimension_semantics = [#tpu.dimension_semantics<parallel>], iteration_bounds = array<i64: 1>, scalar_prefetch = 0 : i64, scratch_operands = 0 : i64, tpu.core_type = #tpu.core_type<tc>, window_params = [{transform_indices = @transform_0, window_bounds = array<i64: 8, 128>}, {pipeline_mode = #tpu.pipeline_mode<synchronous>, transform_indices = @transform_1, window_bounds = array<i64: 128, 128>}, {pipeline_mode = #tpu.pipeline_mode<synchronous>, transform_indices = @transform_2, window_bounds = array<i64: 1, 128>}, {pipeline_mode = #tpu.pipeline_mode<synchronous>, transform_indices = @transform_3, window_bounds = array<i64: 128, 128>}, {pipeline_mode = #tpu.pipeline_mode<synchronous>, transform_indices = @transform_4, window_bounds = array<i64: 1, 128>}, {pipeline_mode = #tpu.pipeline_mode<synchronous>, transform_indices = @transform_5, window_bounds = array<i64: 128, 128>}, {pipeline_mode = #tpu.pipeline_mode<synchronous>, transform_indices = @transform_6, window_bounds = array<i64: 1, 128>}, {transform_indices = @transform_7, window_bounds = array<i64: 8, 128>}]} {
    %c0 = arith.constant 0 : index
    %c0_0 = arith.constant 0 : index
    %0 = vector.load %arg1[%c0, %c0_0] : memref<8x128xf32, #tpu.memory_space<vmem>>, vector<8x128xf32>
    %1 = arith.truncf %0 : vector<8x128xf32> to vector<8x128xbf16>
    %c0_1 = arith.constant 0 : index
    %c0_2 = arith.constant 0 : index
    %2 = vector.load %arg2[%c0_1, %c0_2] : memref<128x128xbf16, #tpu.memory_space<vmem>>, vector<128x128xbf16>
    %cst = arith.constant dense<0.000000e+00> : vector<8x128xf32>
    %3 = tpu.matmul %1, %2, %cst {dimension_numbers = #tpu.dot_dimension_numbers<[1], [0], [0], [1], [0, 0, 1, 1], [], []>} : vector<8x128xbf16>, vector<128x128xbf16>, vector<8x128xf32> -> vector<8x128xf32>
    %c0_3 = arith.constant 0 : index
    %c0_4 = arith.constant 0 : index
    %4 = vector.load %arg3[%c0_3, %c0_4] : memref<1x128xf32, #tpu.memory_space<vmem>>, vector<1x128xf32>
    %5 = vector.broadcast %4 : vector<1x128xf32> to vector<8x128xf32>
    %6 = arith.addf %3, %5 : vector<8x128xf32>
    %cst_5 = arith.constant 5.000000e-01 : f32
    %7 = vector.broadcast %cst_5 : f32 to vector<8x128xf32>
    %8 = arith.mulf %7, %6 : vector<8x128xf32>
    %9 = math.tanh %8 : vector<8x128xf32>
    %cst_6 = arith.constant 1.000000e+00 : f32
    %10 = vector.broadcast %cst_6 : f32 to vector<8x128xf32>
    %11 = arith.addf %9, %10 : vector<8x128xf32>
    %cst_7 = arith.constant 5.000000e-01 : f32
    %12 = vector.broadcast %cst_7 : f32 to vector<8x128xf32>
    %13 = arith.mulf %12, %11 : vector<8x128xf32>
    %14 = arith.truncf %13 : vector<8x128xf32> to vector<8x128xbf16>
    %c0_8 = arith.constant 0 : index
    %c0_9 = arith.constant 0 : index
    %15 = vector.load %arg4[%c0_8, %c0_9] : memref<128x128xbf16, #tpu.memory_space<vmem>>, vector<128x128xbf16>
    %cst_10 = arith.constant dense<0.000000e+00> : vector<8x128xf32>
    %16 = tpu.matmul %14, %15, %cst_10 {dimension_numbers = #tpu.dot_dimension_numbers<[1], [0], [0], [1], [0, 0, 1, 1], [], []>} : vector<8x128xbf16>, vector<128x128xbf16>, vector<8x128xf32> -> vector<8x128xf32>
    %c0_11 = arith.constant 0 : index
    %c0_12 = arith.constant 0 : index
    %17 = vector.load %arg5[%c0_11, %c0_12] : memref<1x128xf32, #tpu.memory_space<vmem>>, vector<1x128xf32>
    %18 = vector.broadcast %17 : vector<1x128xf32> to vector<8x128xf32>
    %19 = arith.addf %16, %18 : vector<8x128xf32>
    %cst_13 = arith.constant 5.000000e-01 : f32
    %20 = vector.broadcast %cst_13 : f32 to vector<8x128xf32>
    %21 = arith.mulf %20, %19 : vector<8x128xf32>
    %22 = math.tanh %21 : vector<8x128xf32>
    %cst_14 = arith.constant 1.000000e+00 : f32
    %23 = vector.broadcast %cst_14 : f32 to vector<8x128xf32>
    %24 = arith.addf %22, %23 : vector<8x128xf32>
    %cst_15 = arith.constant 5.000000e-01 : f32
    %25 = vector.broadcast %cst_15 : f32 to vector<8x128xf32>
    %26 = arith.mulf %25, %24 : vector<8x128xf32>
    %27 = arith.truncf %26 : vector<8x128xf32> to vector<8x128xbf16>
    %c0_16 = arith.constant 0 : index
    %c0_17 = arith.constant 0 : index
    %28 = vector.load %arg6[%c0_16, %c0_17] : memref<128x128xbf16, #tpu.memory_space<vmem>>, vector<128x128xbf16>
    %cst_18 = arith.constant dense<0.000000e+00> : vector<8x128xf32>
    %29 = tpu.matmul %27, %28, %cst_18 {dimension_numbers = #tpu.dot_dimension_numbers<[1], [0], [0], [1], [0, 0, 1, 1], [], []>} : vector<8x128xbf16>, vector<128x128xbf16>, vector<8x128xf32> -> vector<8x128xf32>
    %c0_19 = arith.constant 0 : index
    %c0_20 = arith.constant 0 : index
    %30 = vector.load %arg7[%c0_19, %c0_20] : memref<1x128xf32, #tpu.memory_space<vmem>>, vector<1x128xf32>
    %31 = vector.broadcast %30 : vector<1x128xf32> to vector<8x128xf32>
    %32 = arith.addf %29, %31 : vector<8x128xf32>
    %c0_21 = arith.constant 0 : index
    %c0_22 = arith.constant 0 : index
    %33 = vector.load %arg8[%c0_21, %c0_22] : memref<8x128xf32, #tpu.memory_space<vmem>>, vector<8x128xf32>
    tpu.vector_store %arg8[%c0_21, %c0_22], %32 {strides = array<i32>} : memref<8x128xf32, #tpu.memory_space<vmem>>, vector<8x128xf32>,
    return
  }
  func.func @transform_0(%arg0: i32) -> (i32, i32) {
    %c0_i32 = arith.constant 0 : i32
    %c0_i32_0 = arith.constant 0 : i32
    return %arg0, %c0_i32 : i32, i32
  }
  func.func @transform_1(%arg0: i32) -> (i32, i32) {
    %c0_i32 = arith.constant 0 : i32
    %c0_i32_0 = arith.constant 0 : i32
    %c0_i32_1 = arith.constant 0 : i32
    return %c0_i32, %c0_i32_0 : i32, i32
  }
  func.func @transform_2(%arg0: i32) -> (i32, i32) {
    %c0_i32 = arith.constant 0 : i32
    %c0_i32_0 = arith.constant 0 : i32
    %c0_i32_1 = arith.constant 0 : i32
    return %c0_i32, %c0_i32_0 : i32, i32
  }
  func.func @transform_3(%arg0: i32) -> (i32, i32) {
    %c0_i32 = arith.constant 0 : i32
    %c0_i32_0 = arith.constant 0 : i32
    %c0_i32_1 = arith.constant 0 : i32
    return %c0_i32, %c0_i32_0 : i32, i32
  }
  func.func @transform_4(%arg0: i32) -> (i32, i32) {
    %c0_i32 = arith.constant 0 : i32
    %c0_i32_0 = arith.constant 0 : i32
    %c0_i32_1 = arith.constant 0 : i32
    return %c0_i32, %c0_i32_0 : i32, i32
  }
  func.func @transform_5(%arg0: i32) -> (i32, i32) {
    %c0_i32 = arith.constant 0 : i32
    %c0_i32_0 = arith.constant 0 : i32
    %c0_i32_1 = arith.constant 0 : i32
    return %c0_i32, %c0_i32_0 : i32, i32
  }
  func.func @transform_6(%arg0: i32) -> (i32, i32) {
    %c0_i32 = arith.constant 0 : i32
    %c0_i32_0 = arith.constant 0 : i32
    %c0_i32_1 = arith.constant 0 : i32
    return %c0_i32, %c0_i32_0 : i32, i32
  }
  func.func @transform_7(%arg0: i32) -> (i32, i32) {
    %c0_i32 = arith.constant 0 : i32
    %c0_i32_0 = arith.constant 0 : i32
    return %arg0, %c0_i32 : i32, i32
  }
}

</mosaic_0001>

<llo_original>
// kernel: tpu_custom_call.1
$region0: #{tpu_custom_call.1}
  #allocation0 [shape = 'u32[]', space=smem, size = 0x4, offset = 0x4, fixed_abs, tag = 'smem constant byte address 0x4 - core index']
  #allocation1 [shape = 'u32[72,128]{1,0:T(1,128)}', space=vmem, size = 0x9000, scoped, tag = 'internal scratch']
  %s0 = inlined_call_operand.hbm [shape: f32[8,128], index: 0, kind: input, shape index: {}]
  %s1 = inlined_call_operand.hbm [shape: bf16[128,128], index: 1, kind: input, shape index: {}]
  %s2 = inlined_call_operand.vmem [shape: f32[1,128], index: 2, kind: input, shape index: {}]
  %s3 = inlined_call_operand.hbm [shape: bf16[128,128], index: 3, kind: input, shape index: {}]
  %s4 = inlined_call_operand.vmem [shape: f32[1,128], index: 4, kind: input, shape index: {}]
  %s5 = inlined_call_operand.hbm [shape: bf16[128,128], index: 5, kind: input, shape index: {}]
  %s6 = inlined_call_operand.vmem [shape: f32[1,128], index: 6, kind: input, shape index: {}]
  %s7 = inlined_call_operand.hbm [shape: f32[8,128], index: 7, kind: output, shape index: {}]
  %s8 = sld [smem:[#allocation0]]
  $region54: #{tpu_custom_call.1} parent=0
    _
  %s10 = ssub.s32 1, %s8
  %s11 = scalar_select 0, %s10, %s8
  $region1: #{tpu_custom_call.1} parent=0
    #allocation2 [shape = 'u8[4096]{0}', space=vmem, size = 0x1000, scoped, tag = 'input window, operand 0, single buffered']
    #allocation3 [shape = 's32[1]{0}', space=sflag, size = 0x4, scoped, tag = 'scoped memory for tpu_custom_call.1']
    #allocation4 [shape = 's32[1]{0}', space=sflag, size = 0x4, scoped, tag = 'scoped memory for tpu_custom_call.1']
    #allocation5 [shape = 'u8[32768]{0}', space=vmem, size = 0x8000, scoped, tag = 'input window, operand 1, single buffered']
    #allocation6 [shape = 's32[1]{0}', space=sflag, size = 0x4, scoped, tag = 'scoped memory for tpu_custom_call.1']
    #allocation7 [shape = 'u8[32768]{0}', space=vmem, size = 0x8000, scoped, tag = 'input window, operand 3, single buffered']
    #allocation8 [shape = 'u8[32768]{0}', space=vmem, size = 0x8000, scoped, tag = 'input window, operand 5, single buffered']
    #allocation9 [shape = 's32[1]{0}', space=sflag, size = 0x4, scoped, tag = 'scoped memory for tpu_custom_call.1']
    #allocation10 [shape = 'u8[4096]{0}', space=vmem, size = 0x1000, scoped, tag = 'output window, operand 0, single buffered']
    %12 = vsyncpa [#allocation3], 0
    %13 = vsyncpa [#allocation6], 0
    %14 = vsyncpa [#allocation9], 0
    %15 = vsyncpa [#allocation4], 0
    // Predicated region
    $region2: #{tpu_custom_call.1} parent=1 // pred_check
      _
    $region3: #{tpu_custom_call.1} parent=1 // pred_check_branch
      %17 = sbr.rel (0) target = $region5
    $region4: #{tpu_custom_call.1} parent=1 // pred_region
      %19 = vsyncadd [#allocation3], 0
      %s21 = sshll.u32 %s0, 4
      %s22 = int_to_ptr.hbm [resolvable:$true] %s21
      %s23 = sshll.u32 [#allocation2], 4
      %s24 = int_to_ptr.vmem [resolvable:$true] %s23
      %26 = dma.hbm_to_vmem [thread:$0]  %s22, 128, %s24, [#allocation3]
    $region5: #{tpu_custom_call.1} parent=1 // pred_fallthru
      _
    // Predicated region
    $region6: #{tpu_custom_call.1} parent=1 // pred_check
      _
    $region7: #{tpu_custom_call.1} parent=1 // pred_check_branch
      %28 = sbr.rel (0) target = $region9
    $region8: #{tpu_custom_call.1} parent=1 // pred_region
      %30 = vsyncadd [#allocation6], 0
      %s31 = sshll.u32 %s1, 4
      %s32 = int_to_ptr.hbm [resolvable:$true] %s31
      %s33 = sshll.u32 [#allocation5], 4
      %s34 = int_to_ptr.vmem [resolvable:$true] %s33
      %39 = dma.hbm_to_vmem [thread:$0]  %s32, 1024, %s34, [#allocation6], 64, 64, 4
    $region9: #{tpu_custom_call.1} parent=1 // pred_fallthru
      _
    // Predicated region
    $region10: #{tpu_custom_call.1} parent=1 // pred_check
      _
    $region11: #{tpu_custom_call.1} parent=1 // pred_check_branch
      %41 = sbr.rel (0) target = $region13
    $region12: #{tpu_custom_call.1} parent=1 // pred_region
      _
    $region13: #{tpu_custom_call.1} parent=1 // pred_fallthru
      _
    // Predicated region
    $region14: #{tpu_custom_call.1} parent=1 // pred_check
      _
    $region15: #{tpu_custom_call.1} parent=1 // pred_check_branch
      %43 = sbr.rel (0) target = $region17
    $region16: #{tpu_custom_call.1} parent=1 // pred_region
      %45 = vsyncadd [#allocation6], 0
      %s46 = sshll.u32 %s3, 4
      %s47 = int_to_ptr.hbm [resolvable:$true] %s46
      %s48 = sshll.u32 [#allocation7], 4
      %s49 = int_to_ptr.vmem [resolvable:$true] %s48
      %54 = dma.hbm_to_vmem [thread:$0]  %s47, 1024, %s49, [#allocation6], 64, 64, 4
    $region17: #{tpu_custom_call.1} parent=1 // pred_fallthru
      _
    // Predicated region
    $region18: #{tpu_custom_call.1} parent=1 // pred_check
      _
    $region19: #{tpu_custom_call.1} parent=1 // pred_check_branch
      %56 = sbr.rel (0) target = $region21
    $region20: #{tpu_custom_call.1} parent=1 // pred_region
      _
    $region21: #{tpu_custom_call.1} parent=1 // pred_fallthru
      _
    // Predicated region
    $region22: #{tpu_custom_call.1} parent=1 // pred_check
      _
    $region23: #{tpu_custom_call.1} parent=1 // pred_check_branch
      %58 = sbr.rel (0) target = $region25
    $region24: #{tpu_custom_call.1} parent=1 // pred_region
      %60 = vsyncadd [#allocation9], 0
      %s61 = sshll.u32 %s5, 4
      %s62 = int_to_ptr.hbm [resolvable:$true] %s61
      %s63 = sshll.u32 [#allocation8], 4
      %s64 = int_to_ptr.vmem [resolvable:$true] %s63
      %69 = dma.hbm_to_vmem [thread:$0]  %s62, 1024, %s64, [#allocation9], 64, 64, 4
    $region25: #{tpu_custom_call.1} parent=1 // pred_fallthru
      _
    // Predicated region
    $region26: #{tpu_custom_call.1} parent=1 // pred_check
      _
    $region27: #{tpu_custom_call.1} parent=1 // pred_check_branch
      %71 = sbr.rel (0) target = $region29
    $region28: #{tpu_custom_call.1} parent=1 // pred_region
      _
    $region29: #{tpu_custom_call.1} parent=1 // pred_fallthru
      _
    // Predicated region
    $region30: #{tpu_custom_call.1} parent=1 // pred_check
      _
    $region31: #{tpu_custom_call.1} parent=1 // pred_check_branch
      %73 = sbr.rel (0) target = $region33
    $region32: #{tpu_custom_call.1} parent=1 // pred_region
      %75 = dma.done [#allocation3], 128
    $region33: #{tpu_custom_call.1} parent=1 // pred_fallthru
      _
    // Predicated region
    $region34: #{tpu_custom_call.1} parent=1 // pred_check
      _
    $region35: #{tpu_custom_call.1} parent=1 // pred_check_branch
      %77 = sbr.rel (0) target = $region37
    $region36: #{tpu_custom_call.1} parent=1 // pred_region
      %79 = dma.done [#allocation6], 1024
    $region37: #{tpu_custom_call.1} parent=1 // pred_fallthru
      _
    // Predicated region
    $region38: #{tpu_custom_call.1} parent=1 // pred_check
      _
    $region39: #{tpu_custom_call.1} parent=1 // pred_check_branch
      %81 = sbr.rel (0) target = $region41
    $region40: #{tpu_custom_call.1} parent=1 // pred_region
      %83 = dma.done [#allocation6], 1024
    $region41: #{tpu_custom_call.1} parent=1 // pred_fallthru
      _
    // Predicated region
    $region42: #{tpu_custom_call.1} parent=1 // pred_check
      _
    $region43: #{tpu_custom_call.1} parent=1 // pred_check_branch
      %85 = sbr.rel (0) target = $region45
    $region44: #{tpu_custom_call.1} parent=1 // pred_region
      %87 = dma.done [#allocation9], 1024
    $region45: #{tpu_custom_call.1} parent=1 // pred_fallthru
      _
    %v88 = vld [vmem:[#allocation2] sm:$0xff]
    %v89 = vpack.c.bf16 %v88, %v88
    %v90 = vld [vmem:[#allocation5] sm:$0xf]
    %v91 = vld [vmem:[#allocation5 + $0x4] sm:$0xf]
    %v92 = vld [vmem:[#allocation5 + $0x8] sm:$0xf]
    %v93 = vld [vmem:[#allocation5 + $0xc] sm:$0xf]
    %v94 = vld [vmem:[#allocation5 + $0x10] sm:$0xf]
    %v95 = vld [vmem:[#allocation5 + $0x14] sm:$0xf]
    %v96 = vld [vmem:[#allocation5 + $0x18] sm:$0xf]
    %v97 = vld [vmem:[#allocation5 + $0x1c] sm:$0xf]
    %v98 = vld [vmem:[#allocation5 + $0x20] sm:$0xf]
    %v99 = vld [vmem:[#allocation5 + $0x24] sm:$0xf]
    %v100 = vld [vmem:[#allocation5 + $0x28] sm:$0xf]
    %v101 = vld [vmem:[#allocation5 + $0x2c] sm:$0xf]
    %v102 = vld [vmem:[#allocation5 + $0x30] sm:$0xf]
    %v103 = vld [vmem:[#allocation5 + $0x34] sm:$0xf]
    %v104 = vld [vmem:[#allocation5 + $0x38] sm:$0xf]
    %v105 = vld [vmem:[#allocation5 + $0x3c] sm:$0xf]
    %v106 = vld [vmem:[%s2] sm:$0x1]
    %v108 = vperm.slane %v106, 0
    %v126 = vunpack.c.l.b16 %v90
    %v127 = vunpack.c.l.b16 %v91
    %v128 = vunpack.c.l.b16 %v92
    %v129 = vunpack.c.l.b16 %v93
    %v130 = vunpack.c.l.b16 %v94
    %v131 = vunpack.c.l.b16 %v95
    %v132 = vunpack.c.l.b16 %v96
    %v133 = vunpack.c.l.b16 %v97
    %v134 = vunpack.c.l.b16 %v98
    %v135 = vunpack.c.l.b16 %v99
    %v136 = vunpack.c.l.b16 %v100
    %v137 = vunpack.c.l.b16 %v101
    %v138 = vunpack.c.l.b16 %v102
    %v139 = vunpack.c.l.b16 %v103
    %v140 = vunpack.c.l.b16 %v104
    %v141 = vunpack.c.l.b16 %v105
    %v142 = vpack.c.b16 %v127, %v126
    %v143 = vpack.c.b16 %v129, %v128
    %v144 = vpack.c.b16 %v131, %v130
    %v145 = vpack.c.b16 %v133, %v132
    %v146 = vpack.c.b16 %v135, %v134
    %v147 = vpack.c.b16 %v137, %v136
    %v148 = vpack.c.b16 %v139, %v138
    %v149 = vpack.c.b16 %v141, %v140
    %158 = vmatpush.bf16.msra.mxu0 %v149
    %159 = vmatpush.bf16.msra.mxu0 %v148
    %160 = vmatpush.bf16.msra.mxu0 %v147
    %161 = vmatpush.bf16.msra.mxu0 %v146
    %162 = vmatpush.bf16.msra.mxu0 %v145
    %163 = vmatpush.bf16.msra.mxu0 %v144
    %164 = vmatpush.bf16.msra.mxu0 %v143
    %165 = vmatpush.bf16.msra.mxu0 %v142
    %166 = vmatmul.bf16.gmra.mxu0 %v89
    %v167 = vpop.f32.mrf.mxu0
    %v168 = vadd.f32 %v108, %v167
    %v169 = vpop.f32.mrf.mxu0
    %170 = vdwg.mxu0
    %v171 = vmul.f32 %v168, 0.5
    %v172 = vtanh.pop %v171
    %v173 = vadd.f32 %v172, 1.0
    %v174 = vmul.f32 %v173, 0.5
    %v175 = vpack.c.bf16 %v174, %v174
    %v176 = vld [vmem:[#allocation7] sm:$0xf]
    %v177 = vld [vmem:[#allocation7 + $0x4] sm:$0xf]
    %v178 = vld [vmem:[#allocation7 + $0x8] sm:$0xf]
    %v179 = vld [vmem:[#allocation7 + $0xc] sm:$0xf]
    %v180 = vld [vmem:[#allocation7 + $0x10] sm:$0xf]
    %v181 = vld [vmem:[#allocation7 + $0x14] sm:$0xf]
    %v182 = vld [vmem:[#allocation7 + $0x18] sm:$0xf]
    %v183 = vld [vmem:[#allocation7 + $0x1c] sm:$0xf]
    %v184 = vld [vmem:[#allocation7 + $0x20] sm:$0xf]
    %v185 = vld [vmem:[#allocation7 + $0x24] sm:$0xf]
    %v186 = vld [vmem:[#allocation7 + $0x28] sm:$0xf]
    %v187 = vld [vmem:[#allocation7 + $0x2c] sm:$0xf]
    %v188 = vld [vmem:[#allocation7 + $0x30] sm:$0xf]
    %v189 = vld [vmem:[#allocation7 + $0x34] sm:$0xf]
    %v190 = vld [vmem:[#allocation7 + $0x38] sm:$0xf]
    %v191 = vld [vmem:[#allocation7 + $0x3c] sm:$0xf]
    %v192 = vld [vmem:[%s4] sm:$0x1]
    %v194 = vperm.slane %v192, 0
    %v212 = vunpack.c.l.b16 %v176
    %v213 = vunpack.c.l.b16 %v177
    %v214 = vunpack.c.l.b16 %v178
    %v215 = vunpack.c.l.b16 %v179
    %v216 = vunpack.c.l.b16 %v180
    %v217 = vunpack.c.l.b16 %v181
    %v218 = vunpack.c.l.b16 %v182
    %v219 = vunpack.c.l.b16 %v183
    %v220 = vunpack.c.l.b16 %v184
    %v221 = vunpack.c.l.b16 %v185
    %v222 = vunpack.c.l.b16 %v186
    %v223 = vunpack.c.l.b16 %v187
    %v224 = vunpack.c.l.b16 %v188
    %v225 = vunpack.c.l.b16 %v189
    %v226 = vunpack.c.l.b16 %v190
    %v227 = vunpack.c.l.b16 %v191
    %v228 = vpack.c.b16 %v213, %v212
    %v229 = vpack.c.b16 %v215, %v214
    %v230 = vpack.c.b16 %v217, %v216
    %v231 = vpack.c.b16 %v219, %v218
    %v232 = vpack.c.b16 %v221, %v220
    %v233 = vpack.c.b16 %v223, %v222
    %v234 = vpack.c.b16 %v225, %v224
    %v235 = vpack.c.b16 %v227, %v226
    %244 = vmatpush.bf16.msra.mxu0 %v235
    %245 = vmatpush.bf16.msra.mxu0 %v234
    %246 = vmatpush.bf16.msra.mxu0 %v233
    %247 = vmatpush.bf16.msra.mxu0 %v232
    %248 = vmatpush.bf16.msra.mxu0 %v231
    %249 = vmatpush.bf16.msra.mxu0 %v230
    %250 = vmatpush.bf16.msra.mxu0 %v229
    %251 = vmatpush.bf16.msra.mxu0 %v228
    %252 = vmatmul.bf16.gmra.mxu0 %v175
    %v253 = vpop.f32.mrf.mxu0
    %v254 = vadd.f32 %v194, %v253
    %v255 = vpop.f32.mrf.mxu0
    %256 = vdwg.mxu0
    %v257 = vmul.f32 %v254, 0.5
    %v258 = vtanh.pop %v257
    %v259 = vadd.f32 %v258, 1.0
    %v260 = vmul.f32 %v259, 0.5
    %v261 = vpack.c.bf16 %v260, %v260
    %v262 = vld [vmem:[#allocation8] sm:$0xf]
    %v263 = vld [vmem:[#allocation8 + $0x4] sm:$0xf]
    %v264 = vld [vmem:[#allocation8 + $0x8] sm:$0xf]
    %v265 = vld [vmem:[#allocation8 + $0xc] sm:$0xf]
    %v266 = vld [vmem:[#allocation8 + $0x10] sm:$0xf]
    %v267 = vld [vmem:[#allocation8 + $0x14] sm:$0xf]
    %v268 = vld [vmem:[#allocation8 + $0x18] sm:$0xf]
    %v269 = vld [vmem:[#allocation8 + $0x1c] sm:$0xf]
    %v270 = vld [vmem:[#allocation8 + $0x20] sm:$0xf]
    %v271 = vld [vmem:[#allocation8 + $0x24] sm:$0xf]
    %v272 = vld [vmem:[#allocation8 + $0x28] sm:$0xf]
    %v273 = vld [vmem:[#allocation8 + $0x2c] sm:$0xf]
    %v274 = vld [vmem:[#allocation8 + $0x30] sm:$0xf]
    %v275 = vld [vmem:[#allocation8 + $0x34] sm:$0xf]
    %v276 = vld [vmem:[#allocation8 + $0x38] sm:$0xf]
    %v277 = vld [vmem:[#allocation8 + $0x3c] sm:$0xf]
    %v278 = vld [vmem:[%s6] sm:$0x1]
    %v280 = vperm.slane %v278, 0
    %v298 = vunpack.c.l.b16 %v262
    %v299 = vunpack.c.l.b16 %v263
    %v300 = vunpack.c.l.b16 %v264
    %v301 = vunpack.c.l.b16 %v265
    %v302 = vunpack.c.l.b16 %v266
    %v303 = vunpack.c.l.b16 %v267
    %v304 = vunpack.c.l.b16 %v268
    %v305 = vunpack.c.l.b16 %v269
    %v306 = vunpack.c.l.b16 %v270
    %v307 = vunpack.c.l.b16 %v271
    %v308 = vunpack.c.l.b16 %v272
    %v309 = vunpack.c.l.b16 %v273
    %v310 = vunpack.c.l.b16 %v274
    %v311 = vunpack.c.l.b16 %v275
    %v312 = vunpack.c.l.b16 %v276
    %v313 = vunpack.c.l.b16 %v277
    %v314 = vpack.c.b16 %v299, %v298
    %v315 = vpack.c.b16 %v301, %v300
    %v316 = vpack.c.b16 %v303, %v302
    %v317 = vpack.c.b16 %v305, %v304
    %v318 = vpack.c.b16 %v307, %v306
    %v319 = vpack.c.b16 %v309, %v308
    %v320 = vpack.c.b16 %v311, %v310
    %v321 = vpack.c.b16 %v313, %v312
    %330 = vmatpush.bf16.msra.mxu0 %v321
    %331 = vmatpush.bf16.msra.mxu0 %v320
    %332 = vmatpush.bf16.msra.mxu0 %v319
    %333 = vmatpush.bf16.msra.mxu0 %v318
    %334 = vmatpush.bf16.msra.mxu0 %v317
    %335 = vmatpush.bf16.msra.mxu0 %v316
    %336 = vmatpush.bf16.msra.mxu0 %v315
    %337 = vmatpush.bf16.msra.mxu0 %v314
    %338 = vmatmul.bf16.gmra.mxu0 %v261
    %v339 = vpop.f32.mrf.mxu0
    %v340 = vadd.f32 %v280, %v339
    %v341 = vpop.f32.mrf.mxu0
    %342 = vdwg.mxu0
    %343 = vst [vmem:[#allocation10] sm:$0xff] %v340
    // Predicated region
    $region46: #{tpu_custom_call.1} parent=1 // pred_check
      _
    $region47: #{tpu_custom_call.1} parent=1 // pred_check_branch
      %345 = sbr.rel (0) target = $region49
    $region48: #{tpu_custom_call.1} parent=1 // pred_region
      %347 = vsyncadd [#allocation4], 0
      %s349 = sshll.u32 [#allocation10], 4
      %s350 = int_to_ptr.vmem [resolvable:$true] %s349
      %s351 = sshll.u32 %s7, 4
      %s352 = int_to_ptr.hbm [resolvable:$true] %s351
      %354 = dma.vmem_to_hbm [thread:$0]  %s350, 128, %s352, [#allocation4]
    $region49: #{tpu_custom_call.1} parent=1 // pred_fallthru
      _
    // Predicated region
    $region50: #{tpu_custom_call.1} parent=1 // pred_check
      _
    $region51: #{tpu_custom_call.1} parent=1 // pred_check_branch
      %356 = sbr.rel (0) target = $region53
    $region52: #{tpu_custom_call.1} parent=1 // pred_region
      %358 = dma.done [#allocation4], 128
    $region53: #{tpu_custom_call.1} parent=1 // pred_fallthru
      _
    %359 = vsyncpa [#allocation3], 1
    %360 = vsyncpa [#allocation6], 1
    %361 = vsyncpa [#allocation9], 1
    %362 = vsyncpa [#allocation4], 1

// kernel: tpu_custom_call.1
$region0: #{tpu_custom_call.1}
  #allocation0 [shape = 'u32[]', space=smem, size = 0x4, offset = 0x4, fixed_abs, tag = 'smem constant byte address 0x4 - core index']
  #allocation1 [shape = 'u32[72,128]{1,0:T(1,128)}', space=vmem, size = 0x9000, scoped, tag = 'internal scratch']
  %s0 = inlined_call_operand.hbm [shape: f32[8,128], index: 0, kind: input, shape index: {}]
  %s1 = inlined_call_operand.hbm [shape: bf16[128,128], index: 1, kind: input, shape index: {}]
  %s2 = inlined_call_operand.vmem [shape: f32[1,128], index: 2, kind: input, shape index: {}]
  %s3 = inlined_call_operand.hbm [shape: bf16[128,128], index: 3, kind: input, shape index: {}]
  %s4 = inlined_call_operand.vmem [shape: f32[1,128], index: 4, kind: input, shape index: {}]
  %s5 = inlined_call_operand.hbm [shape: bf16[128,128], index: 5, kind: input, shape index: {}]
  %s6 = inlined_call_operand.vmem [shape: f32[1,128], index: 6, kind: input, shape index: {}]
  %s7 = inlined_call_operand.hbm [shape: f32[8,128], index: 7, kind: output, shape index: {}]
  %s8 = sld [smem:[#allocation0]]
  $region54: #{tpu_custom_call.1} parent=0
    _
  %s10 = ssub.s32 1, %s8
  %s11 = scalar_select 0, %s10, %s8
  $region1: #{tpu_custom_call.1} parent=0
    #allocation2 [shape = 'u8[4096]{0}', space=vmem, size = 0x1000, scoped, tag = 'input window, operand 0, single buffered']
    #allocation3 [shape = 's32[1]{0}', space=sflag, size = 0x4, scoped, tag = 'scoped memory for tpu_custom_call.1']
    #allocation4 [shape = 's32[1]{0}', space=sflag, size = 0x4, scoped, tag = 'scoped memory for tpu_custom_call.1']
    #allocation5 [shape = 'u8[32768]{0}', space=vmem, size = 0x8000, scoped, tag = 'input window, operand 1, single buffered']
    #allocation6 [shape = 's32[1]{0}', space=sflag, size = 0x4, scoped, tag = 'scoped memory for tpu_custom_call.1']
    #allocation7 [shape = 'u8[32768]{0}', space=vmem, size = 0x8000, scoped, tag = 'input window, operand 3, single buffered']
    #allocation8 [shape = 'u8[32768]{0}', space=vmem, size = 0x8000, scoped, tag = 'input window, operand 5, single buffered']
    #allocation9 [shape = 's32[1]{0}', space=sflag, size = 0x4, scoped, tag = 'scoped memory for tpu_custom_call.1']
    #allocation10 [shape = 'u8[4096]{0}', space=vmem, size = 0x1000, scoped, tag = 'output window, operand 0, single buffered']
    %12 = vsyncpa [#allocation3], 0
    %13 = vsyncpa [#allocation6], 0
    %14 = vsyncpa [#allocation9], 0
    %15 = vsyncpa [#allocation4], 0
    // Predicated region
    $region2: #{tpu_custom_call.1} parent=1 // pred_check
      _
    $region3: #{tpu_custom_call.1} parent=1 // pred_check_branch
      %17 = sbr.rel (0) target = $region5
    $region4: #{tpu_custom_call.1} parent=1 // pred_region
      %19 = vsyncadd [#allocation3], 0
      %s21 = sshll.u32 %s0, 4
      %s22 = int_to_ptr.hbm [resolvable:$true] %s21
      %s23 = sshll.u32 [#allocation2], 4
      %s24 = int_to_ptr.vmem [resolvable:$true] %s23
      %26 = dma.hbm_to_vmem [thread:$0]  %s22, 128, %s24, [#allocation3]
    $region5: #{tpu_custom_call.1} parent=1 // pred_fallthru
      _
    // Predicated region
    $region6: #{tpu_custom_call.1} parent=1 // pred_check
      _
    $region7: #{tpu_custom_call.1} parent=1 // pred_check_branch
      %28 = sbr.rel (0) target = $region9
    $region8: #{tpu_custom_call.1} parent=1 // pred_region
      %30 = vsyncadd [#allocation6], 0
      %s31 = sshll.u32 %s1, 4
      %s32 = int_to_ptr.hbm [resolvable:$true] %s31
      %s33 = sshll.u32 [#allocation5], 4
      %s34 = int_to_ptr.vmem [resolvable:$true] %s33
      %39 = dma.hbm_to_vmem [thread:$0]  %s32, 1024, %s34, [#allocation6], 64, 64, 4
    $region9: #{tpu_custom_call.1} parent=1 // pred_fallthru
      _
    // Predicated region
    $region10: #{tpu_custom_call.1} parent=1 // pred_check
      _
    $region11: #{tpu_custom_call.1} parent=1 // pred_check_branch
      %41 = sbr.rel (0) target = $region13
    $region12: #{tpu_custom_call.1} parent=1 // pred_region
      _
    $region13: #{tpu_custom_call.1} parent=1 // pred_fallthru
      _
    // Predicated region
    $region14: #{tpu_custom_call.1} parent=1 // pred_check
      _
    $region15: #{tpu_custom_call.1} parent=1 // pred_check_branch
      %43 = sbr.rel (0) target = $region17
    $region16: #{tpu_custom_call.1} parent=1 // pred_region
      %45 = vsyncadd [#allocation6], 0
      %s46 = sshll.u32 %s3, 4
      %s47 = int_to_ptr.hbm [resolvable:$true] %s46
      %s48 = sshll.u32 [#allocation7], 4
      %s49 = int_to_ptr.vmem [resolvable:$true] %s48
      %54 = dma.hbm_to_vmem [thread:$0]  %s47, 1024, %s49, [#allocation6], 64, 64, 4
    $region17: #{tpu_custom_call.1} parent=1 // pred_fallthru
      _
    // Predicated region
    $region18: #{tpu_custom_call.1} parent=1 // pred_check
      _
    $region19: #{tpu_custom_call.1} parent=1 // pred_check_branch
      %56 = sbr.rel (0) target = $region21
    $region20: #{tpu_custom_call.1} parent=1 // pred_region
      _
    $region21: #{tpu_custom_call.1} parent=1 // pred_fallthru
      _
    // Predicated region
    $region22: #{tpu_custom_call.1} parent=1 // pred_check
      _
    $region23: #{tpu_custom_call.1} parent=1 // pred_check_branch
      %58 = sbr.rel (0) target = $region25
    $region24: #{tpu_custom_call.1} parent=1 // pred_region
      %60 = vsyncadd [#allocation9], 0
      %s61 = sshll.u32 %s5, 4
      %s62 = int_to_ptr.hbm [resolvable:$true] %s61
      %s63 = sshll.u32 [#allocation8], 4
      %s64 = int_to_ptr.vmem [resolvable:$true] %s63
      %69 = dma.hbm_to_vmem [thread:$0]  %s62, 1024, %s64, [#allocation9], 64, 64, 4
    $region25: #{tpu_custom_call.1} parent=1 // pred_fallthru
      _
    // Predicated region
    $region26: #{tpu_custom_call.1} parent=1 // pred_check
      _
    $region27: #{tpu_custom_call.1} parent=1 // pred_check_branch
      %71 = sbr.rel (0) target = $region29
    $region28: #{tpu_custom_call.1} parent=1 // pred_region
      _
    $region29: #{tpu_custom_call.1} parent=1 // pred_fallthru
      _
    // Predicated region
    $region30: #{tpu_custom_call.1} parent=1 // pred_check
      _
    $region31: #{tpu_custom_call.1} parent=1 // pred_check_branch
      %73 = sbr.rel (0) target = $region33
    $region32: #{tpu_custom_call.1} parent=1 // pred_region
      %75 = dma.done [#allocation3], 128
    $region33: #{tpu_custom_call.1} parent=1 // pred_fallthru
      _
    // Predicated region
    $region34: #{tpu_custom_call.1} parent=1 // pred_check
      _
    $region35: #{tpu_custom_call.1} parent=1 // pred_check_branch
      %77 = sbr.rel (0) target = $region37
    $region36: #{tpu_custom_call.1} parent=1 // pred_region
      %79 = dma.done [#allocation6], 1024
    $region37: #{tpu_custom_call.1} parent=1 // pred_fallthru
      _
    // Predicated region
    $region38: #{tpu_custom_call.1} parent=1 // pred_check
      _
    $region39: #{tpu_custom_call.1} parent=1 // pred_check_branch
      %81 = sbr.rel (0) target = $region41
    $region40: #{tpu_custom_call.1} parent=1 // pred_region
      %83 = dma.done [#allocation6], 1024
    $region41: #{tpu_custom_call.1} parent=1 // pred_fallthru
      _
    // Predicated region
    $region42: #{tpu_custom_call.1} parent=1 // pred_check
      _
    $region43: #{tpu_custom_call.1} parent=1 // pred_check_branch
      %85 = sbr.rel (0) target = $region45
    $region44: #{tpu_custom_call.1} parent=1 // pred_region
      %87 = dma.done [#allocation9], 1024
    $region45: #{tpu_custom_call.1} parent=1 // pred_fallthru
      _
    %v88 = vld [vmem:[#allocation2] sm:$0xff]
    %v89 = vpack.c.bf16 %v88, %v88
    %v90 = vld [vmem:[#allocation5] sm:$0xf]
    %v91 = vld [vmem:[#allocation5 + $0x4] sm:$0xf]
    %v92 = vld [vmem:[#allocation5 + $0x8] sm:$0xf]
    %v93 = vld [vmem:[#allocation5 + $0xc] sm:$0xf]
    %v94 = vld [vmem:[#allocation5 + $0x10] sm:$0xf]
    %v95 = vld [vmem:[#allocation5 + $0x14] sm:$0xf]
    %v96 = vld [vmem:[#allocation5 + $0x18] sm:$0xf]
    %v97 = vld [vmem:[#allocation5 + $0x1c] sm:$0xf]
    %v98 = vld [vmem:[#allocation5 + $0x20] sm:$0xf]
    %v99 = vld [vmem:[#allocation5 + $0x24] sm:$0xf]
    %v100 = vld [vmem:[#allocation5 + $0x28] sm:$0xf]
    %v101 = vld [vmem:[#allocation5 + $0x2c] sm:$0xf]
    %v102 = vld [vmem:[#allocation5 + $0x30] sm:$0xf]
    %v103 = vld [vmem:[#allocation5 + $0x34] sm:$0xf]
    %v104 = vld [vmem:[#allocation5 + $0x38] sm:$0xf]
    %v105 = vld [vmem:[#allocation5 + $0x3c] sm:$0xf]
    %v106 = vld [vmem:[%s2] sm:$0x1]
    %v108 = vperm.slane %v106, 0
    %v126 = vunpack.c.l.b16 %v90
    %v127 = vunpack.c.l.b16 %v91
    %v128 = vunpack.c.l.b16 %v92
    %v129 = vunpack.c.l.b16 %v93
    %v130 = vunpack.c.l.b16 %v94
    %v131 = vunpack.c.l.b16 %v95
    %v132 = vunpack.c.l.b16 %v96
    %v133 = vunpack.c.l.b16 %v97
    %v134 = vunpack.c.l.b16 %v98
    %v135 = vunpack.c.l.b16 %v99
    %v136 = vunpack.c.l.b16 %v100
    %v137 = vunpack.c.l.b16 %v101
    %v138 = vunpack.c.l.b16 %v102
    %v139 = vunpack.c.l.b16 %v103
    %v140 = vunpack.c.l.b16 %v104
    %v141 = vunpack.c.l.b16 %v105
    %v142 = vpack.c.b16 %v127, %v126
    %v143 = vpack.c.b16 %v129, %v128
    %v144 = vpack.c.b16 %v131, %v130
    %v145 = vpack.c.b16 %v133, %v132
    %v146 = vpack.c.b16 %v135, %v134
    %v147 = vpack.c.b16 %v137, %v136
    %v148 = vpack.c.b16 %v139, %v138
    %v149 = vpack.c.b16 %v141, %v140
    %158 = vmatpush.bf16.msra.mxu0 %v149
    %159 = vmatpush.bf16.msra.mxu0 %v148
    %160 = vmatpush.bf16.msra.mxu0 %v147
    %161 = vmatpush.bf16.msra.mxu0 %v146
    %162 = vmatpush.bf16.msra.mxu0 %v145
    %163 = vmatpush.bf16.msra.mxu0 %v144
    %164 = vmatpush.bf16.msra.mxu0 %v143
    %165 = vmatpush.bf16.msra.mxu0 %v142
    %166 = vmatmul.bf16.gmra.mxu0 %v89
    %v167 = vpop.f32.mrf.mxu0
    %v168 = vadd.f32 %v108, %v167
    %v169 = vpop.f32.mrf.mxu0
    %170 = vdwg.mxu0
    %v171 = vmul.f32 %v168, 0.5
    %v172 = vtanh.pop %v171
    %v173 = vadd.f32 %v172, 1.0
    %v174 = vmul.f32 %v173, 0.5
    %v175 = vpack.c.bf16 %v174, %v174
    %v176 = vld [vmem:[#allocation7] sm:$0xf]
    %v177 = vld [vmem:[#allocation7 + $0x4] sm:$0xf]
    %v178 = vld [vmem:[#allocation7 + $0x8] sm:$0xf]
    %v179 = vld [vmem:[#allocation7 + $0xc] sm:$0xf]
    %v180 = vld [vmem:[#allocation7 + $0x10] sm:$0xf]
    %v181 = vld [vmem:[#allocation7 + $0x14] sm:$0xf]
    %v182 = vld [vmem:[#allocation7 + $0x18] sm:$0xf]
    %v183 = vld [vmem:[#allocation7 + $0x1c] sm:$0xf]
    %v184 = vld [vmem:[#allocation7 + $0x20] sm:$0xf]
    %v185 = vld [vmem:[#allocation7 + $0x24] sm:$0xf]
    %v186 = vld [vmem:[#allocation7 + $0x28] sm:$0xf]
    %v187 = vld [vmem:[#allocation7 + $0x2c] sm:$0xf]
    %v188 = vld [vmem:[#allocation7 + $0x30] sm:$0xf]
    %v189 = vld [vmem:[#allocation7 + $0x34] sm:$0xf]
    %v190 = vld [vmem:[#allocation7 + $0x38] sm:$0xf]
    %v191 = vld [vmem:[#allocation7 + $0x3c] sm:$0xf]
    %v192 = vld [vmem:[%s4] sm:$0x1]
    %v194 = vperm.slane %v192, 0
    %v212 = vunpack.c.l.b16 %v176
    %v213 = vunpack.c.l.b16 %v177
    %v214 = vunpack.c.l.b16 %v178
    %v215 = vunpack.c.l.b16 %v179
    %v216 = vunpack.c.l.b16 %v180
    %v217 = vunpack.c.l.b16 %v181
    %v218 = vunpack.c.l.b16 %v182
    %v219 = vunpack.c.l.b16 %v183
    %v220 = vunpack.c.l.b16 %v184
    %v221 = vunpack.c.l.b16 %v185
    %v222 = vunpack.c.l.b16 %v186
    %v223 = vunpack.c.l.b16 %v187
    %v224 = vunpack.c.l.b16 %v188
    %v225 = vunpack.c.l.b16 %v189
    %v226 = vunpack.c.l.b16 %v190
    %v227 = vunpack.c.l.b16 %v191
    %v228 = vpack.c.b16 %v213, %v212
    %v229 = vpack.c.b16 %v215, %v214
    %v230 = vpack.c.b16 %v217, %v216
    %v231 = vpack.c.b16 %v219, %v218
    %v232 = vpack.c.b16 %v221, %v220
    %v233 = vpack.c.b16 %v223, %v222
    %v234 = vpack.c.b16 %v225, %v224
    %v235 = vpack.c.b16 %v227, %v226
    %244 = vmatpush.bf16.msra.mxu0 %v235
    %245 = vmatpush.bf16.msra.mxu0 %v234
    %246 = vmatpush.bf16.msra.mxu0 %v233
    %247 = vmatpush.bf16.msra.mxu0 %v232
    %248 = vmatpush.bf16.msra.mxu0 %v231
    %249 = vmatpush.bf16.msra.mxu0 %v230
    %250 = vmatpush.bf16.msra.mxu0 %v229
    %251 = vmatpush.bf16.msra.mxu0 %v228
    %252 = vmatmul.bf16.gmra.mxu0 %v175
    %v253 = vpop.f32.mrf.mxu0
    %v254 = vadd.f32 %v194, %v253
    %v255 = vpop.f32.mrf.mxu0
    %256 = vdwg.mxu0
    %v257 = vmul.f32 %v254, 0.5
    %v258 = vtanh.pop %v257
    %v259 = vadd.f32 %v258, 1.0
    %v260 = vmul.f32 %v259, 0.5
    %v261 = vpack.c.bf16 %v260, %v260
    %v262 = vld [vmem:[#allocation8] sm:$0xf]
    %v263 = vld [vmem:[#allocation8 + $0x4] sm:$0xf]
    %v264 = vld [vmem:[#allocation8 + $0x8] sm:$0xf]
    %v265 = vld [vmem:[#allocation8 + $0xc] sm:$0xf]
    %v266 = vld [vmem:[#allocation8 + $0x10] sm:$0xf]
    %v267 = vld [vmem:[#allocation8 + $0x14] sm:$0xf]
    %v268 = vld [vmem:[#allocation8 + $0x18] sm:$0xf]
    %v269 = vld [vmem:[#allocation8 + $0x1c] sm:$0xf]
    %v270 = vld [vmem:[#allocation8 + $0x20] sm:$0xf]
    %v271 = vld [vmem:[#allocation8 + $0x24] sm:$0xf]
    %v272 = vld [vmem:[#allocation8 + $0x28] sm:$0xf]
    %v273 = vld [vmem:[#allocation8 + $0x2c] sm:$0xf]
    %v274 = vld [vmem:[#allocation8 + $0x30] sm:$0xf]
    %v275 = vld [vmem:[#allocation8 + $0x34] sm:$0xf]
    %v276 = vld [vmem:[#allocation8 + $0x38] sm:$0xf]
    %v277 = vld [vmem:[#allocation8 + $0x3c] sm:$0xf]
    %v278 = vld [vmem:[%s6] sm:$0x1]
    %v280 = vperm.slane %v278, 0
    %v298 = vunpack.c.l.b16 %v262
    %v299 = vunpack.c.l.b16 %v263
    %v300 = vunpack.c.l.b16 %v264
    %v301 = vunpack.c.l.b16 %v265
    %v302 = vunpack.c.l.b16 %v266
    %v303 = vunpack.c.l.b16 %v267
    %v304 = vunpack.c.l.b16 %v268
    %v305 = vunpack.c.l.b16 %v269
    %v306 = vunpack.c.l.b16 %v270
    %v307 = vunpack.c.l.b16 %v271
    %v308 = vunpack.c.l.b16 %v272
    %v309 = vunpack.c.l.b16 %v273
    %v310 = vunpack.c.l.b16 %v274
    %v311 = vunpack.c.l.b16 %v275
    %v312 = vunpack.c.l.b16 %v276
    %v313 = vunpack.c.l.b16 %v277
    %v314 = vpack.c.b16 %v299, %v298
    %v315 = vpack.c.b16 %v301, %v300
    %v316 = vpack.c.b16 %v303, %v302
    %v317 = vpack.c.b16 %v305, %v304
    %v318 = vpack.c.b16 %v307, %v306
    %v319 = vpack.c.b16 %v309, %v308
    %v320 = vpack.c.b16 %v311, %v310
    %v321 = vpack.c.b16 %v313, %v312
    %330 = vmatpush.bf16.msra.mxu0 %v321
    %331 = vmatpush.bf16.msra.mxu0 %v320
    %332 = vmatpush.bf16.msra.mxu0 %v319
    %333 = vmatpush.bf16.msra.mxu0 %v318
    %334 = vmatpush.bf16.msra.mxu0 %v317
    %335 = vmatpush.bf16.msra.mxu0 %v316
    %336 = vmatpush.bf16.msra.mxu0 %v315
    %337 = vmatpush.bf16.msra.mxu0 %v314
    %338 = vmatmul.bf16.gmra.mxu0 %v261
    %v339 = vpop.f32.mrf.mxu0
    %v340 = vadd.f32 %v280, %v339
    %v341 = vpop.f32.mrf.mxu0
    %342 = vdwg.mxu0
    %343 = vst [vmem:[#allocation10] sm:$0xff] %v340
    // Predicated region
    $region46: #{tpu_custom_call.1} parent=1 // pred_check
      _
    $region47: #{tpu_custom_call.1} parent=1 // pred_check_branch
      %345 = sbr.rel (0) target = $region49
    $region48: #{tpu_custom_call.1} parent=1 // pred_region
      %347 = vsyncadd [#allocation4], 0
      %s349 = sshll.u32 [#allocation10], 4
      %s350 = int_to_ptr.vmem [resolvable:$true] %s349
      %s351 = sshll.u32 %s7, 4
      %s352 = int_to_ptr.hbm [resolvable:$true] %s351
      %354 = dma.vmem_to_hbm [thread:$0]  %s350, 128, %s352, [#allocation4]
    $region49: #{tpu_custom_call.1} parent=1 // pred_fallthru
      _
    // Predicated region
    $region50: #{tpu_custom_call.1} parent=1 // pred_check
      _
    $region51: #{tpu_custom_call.1} parent=1 // pred_check_branch
      %356 = sbr.rel (0) target = $region53
    $region52: #{tpu_custom_call.1} parent=1 // pred_region
      %358 = dma.done [#allocation4], 128
    $region53: #{tpu_custom_call.1} parent=1 // pred_fallthru
      _
    %359 = vsyncpa [#allocation3], 1
    %360 = vsyncpa [#allocation6], 1
    %361 = vsyncpa [#allocation9], 1
    %362 = vsyncpa [#allocation4], 1

</llo_original>
